<compile_context>
chip_gen: v7x
topology: tpu7x:2x2x1
jax: 0.10.0
libtpu: 0.0.40
codegen_flags: <defaults>
</compile_context>

<pallas_src>
import functools
import math

import jax
import jax.numpy as jnp
from jax.experimental import pallas as pl
from jax.experimental.pallas import tpu as pltpu

LANE = 128     # last-dim tiling unit
SUBLANE = 8    # second-to-last-dim tiling unit


def _round_up(n, m):
    return ((n + m - 1) // m) * m


def _mlp_kernel(*refs, num_layers):
    """Fused MLP forward on one batch tile.

    refs = (x_ref, w0_ref, b0_ref, ..., w{L-1}_ref, b{L-1}_ref, o_ref)
      x_ref: (BB, D0)   w_l: (D_l, D_{l+1})   b_l: (1, D_{l+1})   o_ref: (BB, D_L)
    Activations/weights are bf16; matmul accumulates in f32; bias-add / ReLU in f32.
    """
    x_ref = refs[0]
    o_ref = refs[-1]

    h = x_ref[...]                                   # bf16
    for l in range(num_layers):
        w = refs[1 + 2 * l][...]                     # bf16
        b = refs[2 + 2 * l][...]                     # bf16
        y = jnp.dot(h, w, preferred_element_type=jnp.float32)
        y = y + b.astype(jnp.float32)                # f32 bias add
        if l < num_layers - 1:                       # hidden layers: ReLU (dropout = identity in eval)
            y = jnp.maximum(y, 0.0)
            h = y.astype(jnp.bfloat16)               # back to bf16 for the next MXU pass
        else:
            o_ref[...] = y.astype(o_ref.dtype)


def prepare_params(params, dtype=jnp.bfloat16):
    """One-time (outside the hot path) pad + cast of the parameter pytree.

    * Input feature dim of W0 is left unpadded.
    * All hidden/output feature dims are zero-padded to multiples of 128 lanes.
    * Everything is stored in bf16 (MXU-native), biases reshaped to (1, D).

    Returns a flat list [W0, b0, W1, b1, ...].
    """
    dims = [params[0][0].shape[0]] + [w.shape[1] for (w, _) in params]
    dims_p = [dims[0]] + [_round_up(d, LANE) for d in dims[1:]]

    out = []
    for l, (w, b) in enumerate(params):
        wp = jnp.pad(w, ((0, dims_p[l] - w.shape[0]),
                         (0, dims_p[l + 1] - w.shape[1]))).astype(dtype)
        bp = jnp.pad(b.reshape(1, -1),
                     ((0, 0), (0, dims_p[l + 1] - b.shape[0]))).astype(dtype)
        out += [wp, bp]
    return out


@functools.partial(jax.jit, static_argnames=("num_classes", "batch_block"))
def intent_classifier_forward(x, padded_params, *, num_classes, batch_block=256):
    """Fused forward pass: hidden layers Linear+ReLU, final layer Linear (logits)."""
    batch, d_in = x.shape
    num_layers = len(padded_params) // 2
    dims_p = [d_in] + [padded_params[2 * l].shape[1] for l in range(num_layers)]
    assert padded_params[0].shape[0] == d_in

    # Batch tiling: multiple of 8 sublanes; cap at half the batch (when batch >= 16)
    # so the "parallel" axis has >= 2 grid steps and shards across v7x's 2 TCs.
    batch_p0 = _round_up(batch, SUBLANE)
    bb = min(_round_up(batch_block, SUBLANE),
             max(SUBLANE, _round_up(batch_p0 // 2, SUBLANE)))
    batch_p = _round_up(batch_p0, bb)
    grid = (batch_p // bb,)

    # Only the batch dim of x is padded; feature dim stays at d_in (full-extent block).
    x_p = jnp.pad(x.astype(jnp.bfloat16), ((0, batch_p - batch), (0, 0)))

    # Block specs: activation tiles walk the batch grid (double-buffered);
    # weights/biases are constant-index -> single-buffered and stay resident.
    in_specs = [pl.BlockSpec((bb, d_in), lambda i: (i, 0))]
    for l in range(num_layers):
        in_specs.append(pl.BlockSpec((dims_p[l], dims_p[l + 1]), lambda i: (0, 0),
                                     pipeline_mode=pl.Buffered(1)))
        in_specs.append(pl.BlockSpec((1, dims_p[l + 1]), lambda i: (0, 0),
                                     pipeline_mode=pl.Buffered(1)))
    out_spec = pl.BlockSpec((bb, dims_p[-1]), lambda i: (i, 0))

    # Explicit VMEM budget: resident bf16 params (single-buffered) +
    # double-buffered bf16 activation tiles + f32 intermediate/spill slack + headroom.
    param_bytes = sum(int(math.prod(p.shape)) * jnp.dtype(p.dtype).itemsize
                      for p in padded_params)
    act_bytes = 2 * (bb * d_in + bb * dims_p[-1]) * 2
    scratch_bytes = 2 * bb * max(dims_p) * 4
    vmem_limit = int(min(max(param_bytes + act_bytes + scratch_bytes + (8 << 20),
                             16 << 20), 64 << 20))

    flops = sum(2 * batch_p * dims_p[l] * dims_p[l + 1] for l in range(num_layers))
    bytes_accessed = 2 * (batch_p * dims_p[0] + batch_p * dims_p[-1]) + param_bytes

    kernel = functools.partial(_mlp_kernel, num_layers=num_layers)
    out_p = pl.pallas_call(
        kernel,
        out_shape=jax.ShapeDtypeStruct((batch_p, dims_p[-1]), jnp.bfloat16),
        grid=grid,
        in_specs=in_specs,
        out_specs=out_spec,
        compiler_params=pltpu.CompilerParams(
            dimension_semantics=("parallel",),
            vmem_limit_bytes=vmem_limit),
        cost_estimate=pl.CostEstimate(flops=flops, transcendentals=0,
                                      bytes_accessed=bytes_accessed),
    )(x_p, *padded_params)

    return out_p[:batch, :num_classes].astype(jnp.float32)


def init_intent_classifier_params(key, input_size, num_layers, units_per_layer,
                                  num_classes):
    """Deterministic parameter init mirroring the PyTorch module's layer shapes.

    Returns list of (W, b) with W: (in, out), b: (out,).
    """
    dims = [input_size] + list(units_per_layer) + [num_classes]
    params = []
    for i in range(len(dims) - 1):
        key, kw, kb = jax.random.split(key, 3)
        fan_in = dims[i]
        bound = 1.0 / jnp.sqrt(fan_in)
        w = jax.random.uniform(kw, (dims[i], dims[i + 1]), jnp.float32,
                               minval=-bound, maxval=bound)
        b = jax.random.uniform(kb, (dims[i + 1],), jnp.float32,
                               minval=-bound, maxval=bound)
        params.append((w, b))
    return params


def _reference_forward(x, params):
    """Plain-JAX reference (eval mode: dropout = identity)."""
    h = x
    n = len(params)
    for i, (w, b) in enumerate(params):
        h = jnp.dot(h, w, precision=jax.lax.Precision.HIGHEST) + b
        if i < n - 1:
            h = jnp.maximum(h, 0.0)
    return h


if __name__ == "__main__":
    # Small shapes consistent with the module: batch=8, input_size=32,
    # num_layers=2 with units_per_layer=[64, 32], num_classes=8.
    key = jax.random.PRNGKey(0)
    k_x, k_p = jax.random.split(key)

    batch = 8
    input_size = 32
    num_layers = 2
    units_per_layer = [64, 32]
    dropout_rate = 0.1  # unused at inference (dropout == identity)
    num_classes = 8

    x = jax.random.normal(k_x, (batch, input_size), jnp.float32)
    params = init_intent_classifier_params(k_p, input_size, num_layers,
                                           units_per_layer, num_classes)

    # One-time prep: pad + bf16-cast the parameters (stays on device across calls).
    padded_params = prepare_params(params)

    logits = intent_classifier_forward(x, padded_params, num_classes=num_classes)
    jax.block_until_ready(logits)

    assert logits.shape == (batch, num_classes)
    assert logits.dtype == jnp.float32

    ref = _reference_forward(x, params)
    assert jnp.allclose(logits, ref, atol=1e-1, rtol=5e-2)

    print("KERNEL_OK")
</pallas_src>

<mosaic_0001>
module attributes {stable_mosaic.version = 11 : i64} {
  func.func @_mlp_kernel(%arg0: i32, %arg1: memref<8x32xbf16, #tpu.memory_space<vmem>>, %arg2: memref<32x128xbf16, #tpu.memory_space<vmem>>, %arg3: memref<1x128xbf16, #tpu.memory_space<vmem>>, %arg4: memref<128x128xbf16, #tpu.memory_space<vmem>>, %arg5: memref<1x128xbf16, #tpu.memory_space<vmem>>, %arg6: memref<128x128xbf16, #tpu.memory_space<vmem>>, %arg7: memref<1x128xbf16, #tpu.memory_space<vmem>>, %arg8: memref<8x128xbf16, #tpu.memory_space<vmem>>) attributes {dimension_semantics = [#tpu.dimension_semantics<parallel>], iteration_bounds = array<i64: 1>, scalar_prefetch = 0 : i64, scratch_operands = 0 : i64, tpu.core_type = #tpu.core_type<tc>, window_params = [{transform_indices = @transform_0, window_bounds = array<i64: 8, 32>}, {pipeline_mode = #tpu.pipeline_mode<synchronous>, transform_indices = @transform_1, window_bounds = array<i64: 32, 128>}, {pipeline_mode = #tpu.pipeline_mode<synchronous>, transform_indices = @transform_2, window_bounds = array<i64: 1, 128>}, {pipeline_mode = #tpu.pipeline_mode<synchronous>, transform_indices = @transform_3, window_bounds = array<i64: 128, 128>}, {pipeline_mode = #tpu.pipeline_mode<synchronous>, transform_indices = @transform_4, window_bounds = array<i64: 1, 128>}, {pipeline_mode = #tpu.pipeline_mode<synchronous>, transform_indices = @transform_5, window_bounds = array<i64: 128, 128>}, {pipeline_mode = #tpu.pipeline_mode<synchronous>, transform_indices = @transform_6, window_bounds = array<i64: 1, 128>}, {transform_indices = @transform_7, window_bounds = array<i64: 8, 128>}]} {
    %c0 = arith.constant 0 : index
    %c0_0 = arith.constant 0 : index
    %0 = vector.load %arg1[%c0, %c0_0] : memref<8x32xbf16, #tpu.memory_space<vmem>>, vector<8x32xbf16>
    %c0_1 = arith.constant 0 : index
    %c0_2 = arith.constant 0 : index
    %1 = vector.load %arg2[%c0_1, %c0_2] : memref<32x128xbf16, #tpu.memory_space<vmem>>, vector<32x128xbf16>
    %c0_3 = arith.constant 0 : index
    %c0_4 = arith.constant 0 : index
    %2 = vector.load %arg3[%c0_3, %c0_4] : memref<1x128xbf16, #tpu.memory_space<vmem>>, vector<1x128xbf16>
    %cst = arith.constant dense<0.000000e+00> : vector<8x128xf32>
    %3 = tpu.matmul %0, %1, %cst {dimension_numbers = #tpu.dot_dimension_numbers<[1], [0], [0], [1], [0, 0, 1, 1], [], []>} : vector<8x32xbf16>, vector<32x128xbf16>, vector<8x128xf32> -> vector<8x128xf32>
    %4 = arith.extf %2 : vector<1x128xbf16> to vector<1x128xf32>
    %5 = vector.broadcast %4 : vector<1x128xf32> to vector<8x128xf32>
    %6 = arith.addf %3, %5 : vector<8x128xf32>
    %cst_5 = arith.constant 0.000000e+00 : f32
    %7 = vector.broadcast %cst_5 : f32 to vector<8x128xf32>
    %8 = arith.maximumf %6, %7 : vector<8x128xf32>
    %9 = arith.truncf %8 : vector<8x128xf32> to vector<8x128xbf16>
    %c0_6 = arith.constant 0 : index
    %c0_7 = arith.constant 0 : index
    %10 = vector.load %arg4[%c0_6, %c0_7] : memref<128x128xbf16, #tpu.memory_space<vmem>>, vector<128x128xbf16>
    %c0_8 = arith.constant 0 : index
    %c0_9 = arith.constant 0 : index
    %11 = vector.load %arg5[%c0_8, %c0_9] : memref<1x128xbf16, #tpu.memory_space<vmem>>, vector<1x128xbf16>
    %cst_10 = arith.constant dense<0.000000e+00> : vector<8x128xf32>
    %12 = tpu.matmul %9, %10, %cst_10 {dimension_numbers = #tpu.dot_dimension_numbers<[1], [0], [0], [1], [0, 0, 1, 1], [], []>} : vector<8x128xbf16>, vector<128x128xbf16>, vector<8x128xf32> -> vector<8x128xf32>
    %13 = arith.extf %11 : vector<1x128xbf16> to vector<1x128xf32>
    %14 = vector.broadcast %13 : vector<1x128xf32> to vector<8x128xf32>
    %15 = arith.addf %12, %14 : vector<8x128xf32>
    %cst_11 = arith.constant 0.000000e+00 : f32
    %16 = vector.broadcast %cst_11 : f32 to vector<8x128xf32>
    %17 = arith.maximumf %15, %16 : vector<8x128xf32>
    %18 = arith.truncf %17 : vector<8x128xf32> to vector<8x128xbf16>
    %c0_12 = arith.constant 0 : index
    %c0_13 = arith.constant 0 : index
    %19 = vector.load %arg6[%c0_12, %c0_13] : memref<128x128xbf16, #tpu.memory_space<vmem>>, vector<128x128xbf16>
    %c0_14 = arith.constant 0 : index
    %c0_15 = arith.constant 0 : index
    %20 = vector.load %arg7[%c0_14, %c0_15] : memref<1x128xbf16, #tpu.memory_space<vmem>>, vector<1x128xbf16>
    %cst_16 = arith.constant dense<0.000000e+00> : vector<8x128xf32>
    %21 = tpu.matmul %18, %19, %cst_16 {dimension_numbers = #tpu.dot_dimension_numbers<[1], [0], [0], [1], [0, 0, 1, 1], [], []>} : vector<8x128xbf16>, vector<128x128xbf16>, vector<8x128xf32> -> vector<8x128xf32>
    %22 = arith.extf %20 : vector<1x128xbf16> to vector<1x128xf32>
    %23 = vector.broadcast %22 : vector<1x128xf32> to vector<8x128xf32>
    %24 = arith.addf %21, %23 : vector<8x128xf32>
    %25 = arith.truncf %24 : vector<8x128xf32> to vector<8x128xbf16>
    %c0_17 = arith.constant 0 : index
    %c0_18 = arith.constant 0 : index
    %26 = vector.load %arg8[%c0_17, %c0_18] : memref<8x128xbf16, #tpu.memory_space<vmem>>, vector<8x128xbf16>
    tpu.vector_store %arg8[%c0_17, %c0_18], %25 {strides = array<i32>} : memref<8x128xbf16, #tpu.memory_space<vmem>>, vector<8x128xbf16>,
    return
  }
  func.func @transform_0(%arg0: i32) -> (i32, i32) {
    %c0_i32 = arith.constant 0 : i32
    %c0_i32_0 = arith.constant 0 : i32
    return %arg0, %c0_i32 : i32, i32
  }
  func.func @transform_1(%arg0: i32) -> (i32, i32) {
    %c0_i32 = arith.constant 0 : i32
    %c0_i32_0 = arith.constant 0 : i32
    %c0_i32_1 = arith.constant 0 : i32
    return %c0_i32, %c0_i32_0 : i32, i32
  }
  func.func @transform_2(%arg0: i32) -> (i32, i32) {
    %c0_i32 = arith.constant 0 : i32
    %c0_i32_0 = arith.constant 0 : i32
    %c0_i32_1 = arith.constant 0 : i32
    return %c0_i32, %c0_i32_0 : i32, i32
  }
  func.func @transform_3(%arg0: i32) -> (i32, i32) {
    %c0_i32 = arith.constant 0 : i32
    %c0_i32_0 = arith.constant 0 : i32
    %c0_i32_1 = arith.constant 0 : i32
    return %c0_i32, %c0_i32_0 : i32, i32
  }
  func.func @transform_4(%arg0: i32) -> (i32, i32) {
    %c0_i32 = arith.constant 0 : i32
    %c0_i32_0 = arith.constant 0 : i32
    %c0_i32_1 = arith.constant 0 : i32
    return %c0_i32, %c0_i32_0 : i32, i32
  }
  func.func @transform_5(%arg0: i32) -> (i32, i32) {
    %c0_i32 = arith.constant 0 : i32
    %c0_i32_0 = arith.constant 0 : i32
    %c0_i32_1 = arith.constant 0 : i32
    return %c0_i32, %c0_i32_0 : i32, i32
  }
  func.func @transform_6(%arg0: i32) -> (i32, i32) {
    %c0_i32 = arith.constant 0 : i32
    %c0_i32_0 = arith.constant 0 : i32
    %c0_i32_1 = arith.constant 0 : i32
    return %c0_i32, %c0_i32_0 : i32, i32
  }
  func.func @transform_7(%arg0: i32) -> (i32, i32) {
    %c0_i32 = arith.constant 0 : i32
    %c0_i32_0 = arith.constant 0 : i32
    return %arg0, %c0_i32 : i32, i32
  }
}

</mosaic_0001>

<llo_original>
// kernel: intent_classifier_forward.1
$region0: #{intent_classifier_forward.1}
  #allocation0 [shape = 'u32[]', space=smem, size = 0x4, offset = 0x4, fixed_abs, tag = 'smem constant byte address 0x4 - core index']
  #allocation1 [shape = 'u32[144,128]{1,0:T(1,128)}', space=vmem, size = 0x12000, scoped, tag = 'internal scratch']
  %s0 = inlined_call_operand.vmem [shape: bf16[8,32], index: 0, kind: input, shape index: {}]
  %s1 = inlined_call_operand.hbm [shape: bf16[32,128], index: 1, kind: input, shape index: {}]
  %s2 = inlined_call_operand.vmem [shape: bf16[1,128], index: 2, kind: input, shape index: {}]
  %s3 = inlined_call_operand.hbm [shape: bf16[128,128], index: 3, kind: input, shape index: {}]
  %s4 = inlined_call_operand.vmem [shape: bf16[1,128], index: 4, kind: input, shape index: {}]
  %s5 = inlined_call_operand.hbm [shape: bf16[128,128], index: 5, kind: input, shape index: {}]
  %s6 = inlined_call_operand.vmem [shape: bf16[1,128], index: 6, kind: input, shape index: {}]
  %s7 = inlined_call_operand.vmem [shape: bf16[8,128], index: 7, kind: output, shape index: {}]
  %s8 = sld [smem:[#allocation0]]
  $region50: #{intent_classifier_forward.1} parent=0
    _
  %s10 = ssub.s32 1, %s8
  %s11 = scalar_select 0, %s10, %s8
  $region1: #{intent_classifier_forward.1} parent=0
    #allocation2 [shape = 'u8[8192]{0}', space=vmem, size = 0x2000, scoped, tag = 'input window, operand 1, single buffered']
    #allocation3 [shape = 's32[1]{0}', space=sflag, size = 0x4, scoped, tag = 'scoped memory for intent_classifier_forward.1']
    #allocation4 [shape = 'u8[32768]{0}', space=vmem, size = 0x8000, scoped, tag = 'input window, operand 3, single buffered']
    #allocation5 [shape = 's32[1]{0}', space=sflag, size = 0x4, scoped, tag = 'scoped memory for intent_classifier_forward.1']
    #allocation6 [shape = 'u8[32768]{0}', space=vmem, size = 0x8000, scoped, tag = 'input window, operand 5, single buffered']
    %12 = vsyncpa [#allocation3], 0
    %13 = vsyncpa [#allocation5], 0
    // Predicated region
    $region2: #{intent_classifier_forward.1} parent=1 // pred_check
      _
    $region3: #{intent_classifier_forward.1} parent=1 // pred_check_branch
      %15 = sbr.rel (0) target = $region5
    $region4: #{intent_classifier_forward.1} parent=1 // pred_region
      _
    $region5: #{intent_classifier_forward.1} parent=1 // pred_fallthru
      _
    // Predicated region
    $region6: #{intent_classifier_forward.1} parent=1 // pred_check
      _
    $region7: #{intent_classifier_forward.1} parent=1 // pred_check_branch
      %17 = sbr.rel (0) target = $region9
    $region8: #{intent_classifier_forward.1} parent=1 // pred_region
      %s19 = ssub.s32 256, 256
      %20 = vsyncadd [#allocation3], %s19
      %s21 = sshll.u32 [#allocation2], 4
      %s22 = int_to_ptr.vmem [resolvable:$true] %s21
      %27 = dma.hbm_to_vmem [thread:$0]  %s1, 256, %s22, [#allocation3], 64, 64, 4
    $region9: #{intent_classifier_forward.1} parent=1 // pred_fallthru
      _
    // Predicated region
    $region10: #{intent_classifier_forward.1} parent=1 // pred_check
      _
    $region11: #{intent_classifier_forward.1} parent=1 // pred_check_branch
      %29 = sbr.rel (0) target = $region13
    $region12: #{intent_classifier_forward.1} parent=1 // pred_region
      _
    $region13: #{intent_classifier_forward.1} parent=1 // pred_fallthru
      _
    // Predicated region
    $region14: #{intent_classifier_forward.1} parent=1 // pred_check
      _
    $region15: #{intent_classifier_forward.1} parent=1 // pred_check_branch
      %31 = sbr.rel (0) target = $region17
    $region16: #{intent_classifier_forward.1} parent=1 // pred_region
      %s33 = ssub.s32 1024, 1024
      %34 = vsyncadd [#allocation5], %s33
      %s35 = sshll.u32 [#allocation4], 4
      %s36 = int_to_ptr.vmem [resolvable:$true] %s35
      %41 = dma.hbm_to_vmem [thread:$0]  %s3, 1024, %s36, [#allocation5], 64, 64, 4
    $region17: #{intent_classifier_forward.1} parent=1 // pred_fallthru
      _
    // Predicated region
    $region18: #{intent_classifier_forward.1} parent=1 // pred_check
      _
    $region19: #{intent_classifier_forward.1} parent=1 // pred_check_branch
      %43 = sbr.rel (0) target = $region21
    $region20: #{intent_classifier_forward.1} parent=1 // pred_region
      _
    $region21: #{intent_classifier_forward.1} parent=1 // pred_fallthru
      _
    // Predicated region
    $region22: #{intent_classifier_forward.1} parent=1 // pred_check
      _
    $region23: #{intent_classifier_forward.1} parent=1 // pred_check_branch
      %45 = sbr.rel (0) target = $region25
    $region24: #{intent_classifier_forward.1} parent=1 // pred_region
      %s47 = ssub.s32 1024, 1024
      %48 = vsyncadd [#allocation5], %s47
      %s49 = sshll.u32 [#allocation6], 4
      %s50 = int_to_ptr.vmem [resolvable:$true] %s49
      %55 = dma.hbm_to_vmem [thread:$0]  %s5, 1024, %s50, [#allocation5], 64, 64, 4
    $region25: #{intent_classifier_forward.1} parent=1 // pred_fallthru
      _
    // Predicated region
    $region26: #{intent_classifier_forward.1} parent=1 // pred_check
      _
    $region27: #{intent_classifier_forward.1} parent=1 // pred_check_branch
      %57 = sbr.rel (0) target = $region29
    $region28: #{intent_classifier_forward.1} parent=1 // pred_region
      _
    $region29: #{intent_classifier_forward.1} parent=1 // pred_fallthru
      _
    // Predicated region
    $region30: #{intent_classifier_forward.1} parent=1 // pred_check
      _
    $region31: #{intent_classifier_forward.1} parent=1 // pred_check_branch
      %59 = sbr.rel (0) target = $region33
    $region32: #{intent_classifier_forward.1} parent=1 // pred_region
      %60 = dma.done [#allocation3], 256
    $region33: #{intent_classifier_forward.1} parent=1 // pred_fallthru
      _
    // Predicated region
    $region34: #{intent_classifier_forward.1} parent=1 // pred_check
      _
    $region35: #{intent_classifier_forward.1} parent=1 // pred_check_branch
      %62 = sbr.rel (0) target = $region37
    $region36: #{intent_classifier_forward.1} parent=1 // pred_region
      %63 = dma.done [#allocation5], 1024
    $region37: #{intent_classifier_forward.1} parent=1 // pred_fallthru
      _
    // Predicated region
    $region38: #{intent_classifier_forward.1} parent=1 // pred_check
      _
    $region39: #{intent_classifier_forward.1} parent=1 // pred_check_branch
      %65 = sbr.rel (0) target = $region41
    $region40: #{intent_classifier_forward.1} parent=1 // pred_region
      %66 = dma.done [#allocation5], 1024
    $region41: #{intent_classifier_forward.1} parent=1 // pred_fallthru
      _
    %v68 = vld [vmem:[%s0] sm:$0xf]
    %v69 = vld [vmem:[#allocation2] sm:$0xf]
    %v70 = vld [vmem:[#allocation2 + $0x4] sm:$0xf]
    %v71 = vld [vmem:[#allocation2 + $0x8] sm:$0xf]
    %v72 = vld [vmem:[#allocation2 + $0xc] sm:$0xf]
    %v73 = vld [vmem:[%s2] sm:$0x1]
    %v74 = vunpack.c.l.bf16 %v73
    %v75 = vlaneseq
    %v76 = vshrl.u32 %v75, 7
    %v77 = vsub.s32 0, %v76
    %v78 = vrot.slane %v74, %v77
    %v83 = vunpack.c.l.b16 %v69
    %v84 = vunpack.c.l.b16 %v70
    %v85 = vunpack.c.l.b16 %v71
    %v86 = vunpack.c.l.b16 %v72
    %v87 = vpack.c.b16 %v84, %v83
    %v88 = vpack.c.b16 %v86, %v85
    %vm91 = vcmask 261120
    %v93 = vsel %vm91, %v68, 0
    %95 = vmatprep.subr.bf16.mxu0 0
    %96 = vmatpush1.bf16.msra.mxu0 %v87
    %97 = vmatprep.subr.bf16.mxu0 0
    %98 = vmatpush1.bf16.msra.mxu0 %v88
    %99 = vmatprep.subr.bf16.mxu0 0
    %100 = vmatpush1.bf16.msra.mxu0 0
    %101 = vmatprep.subr.bf16.mxu0 0
    %102 = vmatpush1.bf16.msra.mxu0 0
    %103 = vmatprep.subr.bf16.mxu0 0
    %104 = vmatpush1.bf16.msra.mxu0 0
    %105 = vmatprep.subr.bf16.mxu0 0
    %106 = vmatpush1.bf16.msra.mxu0 0
    %107 = vmatprep.subr.bf16.mxu0 0
    %108 = vmatpush1.bf16.msra.mxu0 0
    %109 = vmatprep.subr.bf16.mxu0 0
    %110 = vmatpush1.bf16.msra.mxu0 0
    %111 = vmatprep.subr.bf16.mxu0 0
    %112 = vmatpush1.bf16.msra.mxu0 0
    %113 = vmatprep.subr.bf16.mxu0 0
    %114 = vmatpush1.bf16.msra.mxu0 0
    %115 = vmatprep.subr.bf16.mxu0 0
    %116 = vmatpush1.bf16.msra.mxu0 0
    %117 = vmatprep.subr.bf16.mxu0 0
    %118 = vmatpush1.bf16.msra.mxu0 0
    %119 = vmatprep.subr.bf16.mxu0 0
    %120 = vmatpush1.bf16.msra.mxu0 0
    %121 = vmatprep.subr.bf16.mxu0 0
    %122 = vmatpush1.bf16.msra.mxu0 0
    %123 = vmatprep.subr.bf16.mxu0 0
    %124 = vmatpush1.bf16.msra.mxu0 0
    %125 = vmatprep.subr.bf16.mxu0 0
    %126 = vmatpush1.bf16.msra.mxu0 0
    %127 = vmatprep.mubr.bf16.mxu0 0
    %128 = vmatmul.mubr.bf16.gmra.mrb[0].mxu0 %v93
    %v129 = vpop.f32.mrb[0].mxu0
    %v130 = vadd.f32 %v78, %v129
    %v131 = vpop.f32.mrb[0].mxu0
    %v132 = vpop.f32.mrb[0].mxu0
    %v133 = vpop.f32.mrb[0].mxu0
    %134 = vdwg.mxu0
    %v135 = vmax.f32 %v130, 0.0
    %v136 = vpack.c.bf16 %v135, %v135
    %v137 = vld [vmem:[#allocation4] sm:$0xf]
    %v138 = vld [vmem:[#allocation4 + $0x4] sm:$0xf]
    %v139 = vld [vmem:[#allocation4 + $0x8] sm:$0xf]
    %v140 = vld [vmem:[#allocation4 + $0xc] sm:$0xf]
    %v141 = vld [vmem:[#allocation4 + $0x10] sm:$0xf]
    %v142 = vld [vmem:[#allocation4 + $0x14] sm:$0xf]
    %v143 = vld [vmem:[#allocation4 + $0x18] sm:$0xf]
    %v144 = vld [vmem:[#allocation4 + $0x1c] sm:$0xf]
    %v145 = vld [vmem:[#allocation4 + $0x20] sm:$0xf]
    %v146 = vld [vmem:[#allocation4 + $0x24] sm:$0xf]
    %v147 = vld [vmem:[#allocation4 + $0x28] sm:$0xf]
    %v148 = vld [vmem:[#allocation4 + $0x2c] sm:$0xf]
    %v149 = vld [vmem:[#allocation4 + $0x30] sm:$0xf]
    %v150 = vld [vmem:[#allocation4 + $0x34] sm:$0xf]
    %v151 = vld [vmem:[#allocation4 + $0x38] sm:$0xf]
    %v152 = vld [vmem:[#allocation4 + $0x3c] sm:$0xf]
    %v153 = vld [vmem:[%s4] sm:$0x1]
    %v154 = vunpack.c.l.bf16 %v153
    %v155 = vlaneseq
    %v156 = vshrl.u32 %v155, 7
    %v157 = vsub.s32 0, %v156
    %v158 = vrot.slane %v154, %v157
    %v175 = vunpack.c.l.b16 %v137
    %v176 = vunpack.c.l.b16 %v138
    %v177 = vunpack.c.l.b16 %v139
    %v178 = vunpack.c.l.b16 %v140
    %v179 = vunpack.c.l.b16 %v141
    %v180 = vunpack.c.l.b16 %v142
    %v181 = vunpack.c.l.b16 %v143
    %v182 = vunpack.c.l.b16 %v144
    %v183 = vunpack.c.l.b16 %v145
    %v184 = vunpack.c.l.b16 %v146
    %v185 = vunpack.c.l.b16 %v147
    %v186 = vunpack.c.l.b16 %v148
    %v187 = vunpack.c.l.b16 %v149
    %v188 = vunpack.c.l.b16 %v150
    %v189 = vunpack.c.l.b16 %v151
    %v190 = vunpack.c.l.b16 %v152
    %v191 = vpack.c.b16 %v176, %v175
    %v192 = vpack.c.b16 %v178, %v177
    %v193 = vpack.c.b16 %v180, %v179
    %v194 = vpack.c.b16 %v182, %v181
    %v195 = vpack.c.b16 %v184, %v183
    %v196 = vpack.c.b16 %v186, %v185
    %v197 = vpack.c.b16 %v188, %v187
    %v198 = vpack.c.b16 %v190, %v189
    %207 = vmatprep.subr.bf16.mxu0 0
    %208 = vmatpush1.bf16.msra.mxu0 %v191
    %209 = vmatprep.subr.bf16.mxu0 0
    %210 = vmatpush1.bf16.msra.mxu0 %v192
    %211 = vmatprep.subr.bf16.mxu0 0
    %212 = vmatpush1.bf16.msra.mxu0 %v193
    %213 = vmatprep.subr.bf16.mxu0 0
    %214 = vmatpush1.bf16.msra.mxu0 %v194
    %215 = vmatprep.subr.bf16.mxu0 0
    %216 = vmatpush1.bf16.msra.mxu0 %v195
    %217 = vmatprep.subr.bf16.mxu0 0
    %218 = vmatpush1.bf16.msra.mxu0 %v196
    %219 = vmatprep.subr.bf16.mxu0 0
    %220 = vmatpush1.bf16.msra.mxu0 %v197
    %221 = vmatprep.subr.bf16.mxu0 0
    %222 = vmatpush1.bf16.msra.mxu0 %v198
    %223 = vmatprep.subr.bf16.mxu0 0
    %224 = vmatpush1.bf16.msra.mxu0 0
    %225 = vmatprep.subr.bf16.mxu0 0
    %226 = vmatpush1.bf16.msra.mxu0 0
    %227 = vmatprep.subr.bf16.mxu0 0
    %228 = vmatpush1.bf16.msra.mxu0 0
    %229 = vmatprep.subr.bf16.mxu0 0
    %230 = vmatpush1.bf16.msra.mxu0 0
    %231 = vmatprep.subr.bf16.mxu0 0
    %232 = vmatpush1.bf16.msra.mxu0 0
    %233 = vmatprep.subr.bf16.mxu0 0
    %234 = vmatpush1.bf16.msra.mxu0 0
    %235 = vmatprep.subr.bf16.mxu0 0
    %236 = vmatpush1.bf16.msra.mxu0 0
    %237 = vmatprep.subr.bf16.mxu0 0
    %238 = vmatpush1.bf16.msra.mxu0 0
    %239 = vmatprep.mubr.bf16.mxu0 0
    %240 = vmatmul.mubr.bf16.gmra.mrb[0].mxu0 %v136
    %v241 = vpop.f32.mrb[0].mxu0
    %v242 = vadd.f32 %v158, %v241
    %v243 = vpop.f32.mrb[0].mxu0
    %v244 = vpop.f32.mrb[0].mxu0
    %v245 = vpop.f32.mrb[0].mxu0
    %246 = vdwg.mxu0
    %v247 = vmax.f32 %v242, 0.0
    %v248 = vpack.c.bf16 %v247, %v247
    %v249 = vld [vmem:[#allocation6] sm:$0xf]
    %v250 = vld [vmem:[#allocation6 + $0x4] sm:$0xf]
    %v251 = vld [vmem:[#allocation6 + $0x8] sm:$0xf]
    %v252 = vld [vmem:[#allocation6 + $0xc] sm:$0xf]
    %v253 = vld [vmem:[#allocation6 + $0x10] sm:$0xf]
    %v254 = vld [vmem:[#allocation6 + $0x14] sm:$0xf]
    %v255 = vld [vmem:[#allocation6 + $0x18] sm:$0xf]
    %v256 = vld [vmem:[#allocation6 + $0x1c] sm:$0xf]
    %v257 = vld [vmem:[#allocation6 + $0x20] sm:$0xf]
    %v258 = vld [vmem:[#allocation6 + $0x24] sm:$0xf]
    %v259 = vld [vmem:[#allocation6 + $0x28] sm:$0xf]
    %v260 = vld [vmem:[#allocation6 + $0x2c] sm:$0xf]
    %v261 = vld [vmem:[#allocation6 + $0x30] sm:$0xf]
    %v262 = vld [vmem:[#allocation6 + $0x34] sm:$0xf]
    %v263 = vld [vmem:[#allocation6 + $0x38] sm:$0xf]
    %v264 = vld [vmem:[#allocation6 + $0x3c] sm:$0xf]
    %v265 = vld [vmem:[%s6] sm:$0x1]
    %v266 = vunpack.c.l.bf16 %v265
    %v267 = vlaneseq
    %v268 = vshrl.u32 %v267, 7
    %v269 = vsub.s32 0, %v268
    %v270 = vrot.slane %v266, %v269
    %v287 = vunpack.c.l.b16 %v249
    %v288 = vunpack.c.l.b16 %v250
    %v289 = vunpack.c.l.b16 %v251
    %v290 = vunpack.c.l.b16 %v252
    %v291 = vunpack.c.l.b16 %v253
    %v292 = vunpack.c.l.b16 %v254
    %v293 = vunpack.c.l.b16 %v255
    %v294 = vunpack.c.l.b16 %v256
    %v295 = vunpack.c.l.b16 %v257
    %v296 = vunpack.c.l.b16 %v258
    %v297 = vunpack.c.l.b16 %v259
    %v298 = vunpack.c.l.b16 %v260
    %v299 = vunpack.c.l.b16 %v261
    %v300 = vunpack.c.l.b16 %v262
    %v301 = vunpack.c.l.b16 %v263
    %v302 = vunpack.c.l.b16 %v264
    %v303 = vpack.c.b16 %v288, %v287
    %v304 = vpack.c.b16 %v290, %v289
    %v305 = vpack.c.b16 %v292, %v291
    %v306 = vpack.c.b16 %v294, %v293
    %v307 = vpack.c.b16 %v296, %v295
    %v308 = vpack.c.b16 %v298, %v297
    %v309 = vpack.c.b16 %v300, %v299
    %v310 = vpack.c.b16 %v302, %v301
    %319 = vmatprep.subr.bf16.mxu0 0
    %320 = vmatpush1.bf16.msra.mxu0 %v303
    %321 = vmatprep.subr.bf16.mxu0 0
    %322 = vmatpush1.bf16.msra.mxu0 %v304
    %323 = vmatprep.subr.bf16.mxu0 0
    %324 = vmatpush1.bf16.msra.mxu0 %v305
    %325 = vmatprep.subr.bf16.mxu0 0
    %326 = vmatpush1.bf16.msra.mxu0 %v306
    %327 = vmatprep.subr.bf16.mxu0 0
    %328 = vmatpush1.bf16.msra.mxu0 %v307
    %329 = vmatprep.subr.bf16.mxu0 0
    %330 = vmatpush1.bf16.msra.mxu0 %v308
    %331 = vmatprep.subr.bf16.mxu0 0
    %332 = vmatpush1.bf16.msra.mxu0 %v309
    %333 = vmatprep.subr.bf16.mxu0 0
    %334 = vmatpush1.bf16.msra.mxu0 %v310
    %335 = vmatprep.subr.bf16.mxu0 0
    %336 = vmatpush1.bf16.msra.mxu0 0
    %337 = vmatprep.subr.bf16.mxu0 0
    %338 = vmatpush1.bf16.msra.mxu0 0
    %339 = vmatprep.subr.bf16.mxu0 0
    %340 = vmatpush1.bf16.msra.mxu0 0
    %341 = vmatprep.subr.bf16.mxu0 0
    %342 = vmatpush1.bf16.msra.mxu0 0
    %343 = vmatprep.subr.bf16.mxu0 0
    %344 = vmatpush1.bf16.msra.mxu0 0
    %345 = vmatprep.subr.bf16.mxu0 0
    %346 = vmatpush1.bf16.msra.mxu0 0
    %347 = vmatprep.subr.bf16.mxu0 0
    %348 = vmatpush1.bf16.msra.mxu0 0
    %349 = vmatprep.subr.bf16.mxu0 0
    %350 = vmatpush1.bf16.msra.mxu0 0
    %351 = vmatprep.mubr.bf16.mxu0 0
    %352 = vmatmul.mubr.bf16.gmra.mrb[0].mxu0 %v248
    %v353 = vpop.f32.mrb[0].mxu0
    %v354 = vadd.f32 %v270, %v353
    %v355 = vpop.f32.mrb[0].mxu0
    %v356 = vpop.f32.mrb[0].mxu0
    %v357 = vpop.f32.mrb[0].mxu0
    %358 = vdwg.mxu0
    %v359 = vpack.c.bf16 %v354, %v354
    %360 = vst [vmem:[%s7] sm:$0xf] %v359
    // Predicated region
    $region42: #{intent_classifier_forward.1} parent=1 // pred_check
      _
    $region43: #{intent_classifier_forward.1} parent=1 // pred_check_branch
      %362 = sbr.rel (0) target = $region45
    $region44: #{intent_classifier_forward.1} parent=1 // pred_region
      _
    $region45: #{intent_classifier_forward.1} parent=1 // pred_fallthru
      _
    // Predicated region
    $region46: #{intent_classifier_forward.1} parent=1 // pred_check
      _
    $region47: #{intent_classifier_forward.1} parent=1 // pred_check_branch
      %364 = sbr.rel (0) target = $region49
    $region48: #{intent_classifier_forward.1} parent=1 // pred_region
      _
    $region49: #{intent_classifier_forward.1} parent=1 // pred_fallthru
      _
    %365 = vsyncpa [#allocation3], 1
    %366 = vsyncpa [#allocation5], 1

</llo_original>
